<compile_context>
chip_gen: v7x
topology: tpu7x:2x2x1
jax: 0.10.0
libtpu: 0.0.40
codegen_flags: <defaults>
</compile_context>

<pallas_src>
import numpy as np
import jax
import jax.numpy as jnp
from jax.experimental import pallas as pl
from jax.experimental.pallas import tpu as pltpu

EPS = 1e-5  # PyTorch BatchNorm2d default eps


# ----------------------- static helper matrices (glue) ----------------------

def _col_selector(w):
    """sel[dx, xi, xo] = 1 iff xi == xo + dx - 1 (x zero-padding implicit)."""
    sel = np.zeros((3, w, w), np.float32)
    for dx in range(3):
        for xo in range(w):
            xi = xo + dx - 1
            if 0 <= xi < w:
                sel[dx, xi, xo] = 1.0
    return sel


def _banded_weights(w_oihw, w_spatial):
    """(Cout, Cin, 3, 3) conv weight -> (3, W*Cin, W*Cout) banded matrices so
    that sum_dy tap[dy] @ BigW[dy] is the 3x3 conv (pad=1, stride=1)."""
    cout, cin, kh, kw = w_oihw.shape
    sel = jnp.asarray(_col_selector(w_spatial))            # (3, W, W)
    # big[dy, xi, ci, xo, co] = sum_dx sel[dx, xi, xo] * w[co, ci, dy, dx]
    big = jnp.einsum('dix,oced->eicxo', sel, w_oihw)
    return big.reshape(kh, w_spatial * cin, w_spatial * cout)


def _channel_group_matrix(w_spatial, c):
    """(W*C, W*C) 0/1 matrix: column j of (v @ T) sums all columns of v whose
    channel (index % C) equals j % C (lane-tiled per-channel stats)."""
    idx = np.arange(w_spatial * c)
    return (idx[:, None] % c == idx[None, :] % c).astype(np.float32)


# ------------------------------ fused kernel --------------------------------

def _make_kernel(n_img, h, w_sp, c):
    nh = n_img * h
    wc = w_sp * c
    inv_count = 1.0 / float(n_img * h * w_sp)      # elements per channel

    def kernel(a_ref, w1_ref, w2_ref, bn_ref, t_ref, o_ref):
        x = a_ref[...]                             # (N*H, W*C) f32 activation
        t = t_ref[...]                             # (W*C, W*C) f32, loaded once

        # y-tap validity masks (zero padding at image top/bottom), hoisted.
        rid = jax.lax.broadcasted_iota(jnp.int32, (nh, wc), 0)
        if h & (h - 1) == 0:                       # row index within image
            rid = rid & (h - 1)
        else:
            rid = rid % h
        mask_up = rid >= 1                         # dy=0 tap reads row y-1
        mask_dn = rid <= h - 2                     # dy=2 tap reads row y+1

        def taps(v_f32):
            # roll(x, s)[r] = x[r - s]  ->  up[r] = x[r-1], dn[r] = x[r+1]
            up = jnp.where(mask_up, pltpu.roll(v_f32, shift=1, axis=0), 0.0)
            dn = jnp.where(mask_dn, pltpu.roll(v_f32, shift=nh - 1, axis=0), 0.0)
            # K-stacked (dy-major) bf16 MXU operand: (N*H, 3*W*C)
            return jnp.concatenate([up, v_f32, dn], axis=1).astype(jnp.bfloat16)

        def conv_bn(v_f32, w_ref, gamma, beta):
            # 3x3 conv (pad=1, stride=1) as ONE bf16 matmul, f32 accumulation.
            acc = jnp.dot(taps(v_f32), w_ref[...],
                          preferred_element_type=jnp.float32)   # (N*H, W*C)
            # BatchNorm batch stats: reduce rows FIRST, then one tiny
            # channel-grouping matmul on the (2, W*C) row sums.
            rs = jnp.sum(acc, axis=0, keepdims=True)
            rs2 = jnp.sum(acc * acc, axis=0, keepdims=True)
            stats = jnp.dot(jnp.concatenate([rs, rs2], axis=0), t,
                            preferred_element_type=jnp.float32)  # (2, W*C)
            mean = stats[0:1, :] * inv_count
            var = jnp.maximum(stats[1:2, :] * inv_count - mean * mean, 0.0)
            scale = gamma * jax.lax.rsqrt(var + EPS)             # EUP rsqrt
            return acc * scale + (beta - mean * scale)           # fused apply

        out1 = jnp.maximum(
            conv_bn(x, w1_ref, bn_ref[0:1, :], bn_ref[1:2, :]), 0.0)
        out2 = conv_bn(out1, w2_ref, bn_ref[2:3, :], bn_ref[3:4, :])
        # BasicBlock returns conv2(conv1(x)) + x (no final ReLU), residual f32.
        o_ref[...] = out2 + x

    return kernel


# --------------------------------- wrapper ----------------------------------

def basic_block_forward(x_nchw, params):
    """Fused BasicBlock forward (stride=1, pad=1, dilation=1, downsample=None)."""
    w1, g1, b1, w2, g2, b2 = params
    n, c, h, w = x_nchw.shape

    # Lane-dense activation slab: rows = N*H, lanes = W*C (128 at test shape).
    a2d = jnp.transpose(x_nchw, (0, 2, 3, 1)).astype(jnp.float32).reshape(
        n * h, w * c)

    bw1 = _banded_weights(w1, w).reshape(3 * w * c, w * c).astype(jnp.bfloat16)
    bw2 = _banded_weights(w2, w).reshape(3 * w * c, w * c).astype(jnp.bfloat16)
    t = jnp.asarray(_channel_group_matrix(w, c), dtype=jnp.float32)
    bn = jnp.stack([jnp.tile(g1, w), jnp.tile(b1, w),
                    jnp.tile(g2, w), jnp.tile(b2, w)]).astype(jnp.float32)

    def full(shape):
        return pl.BlockSpec(shape, lambda i: (0,) * len(shape))

    out2d = pl.pallas_call(
        _make_kernel(n, h, w, c),
        out_shape=jax.ShapeDtypeStruct((n * h, w * c), jnp.float32),
        grid=(1,),
        in_specs=[full(a2d.shape), full(bw1.shape), full(bw2.shape),
                  full(bn.shape), full(t.shape)],
        out_specs=full((n * h, w * c)),
        compiler_params=pltpu.CompilerParams(
            dimension_semantics=("arbitrary",)),
    )(a2d, bw1, bw2, bn, t)

    return jnp.transpose(out2d.reshape(n, h, w, c), (0, 3, 1, 2))  # NCHW


# --------------------------- pure-JAX reference -----------------------------

def _ref_convbn(x_nhwc, w_oihw, gamma, beta, stride, pad, dilation):
    w_hwio = jnp.transpose(w_oihw, (2, 3, 1, 0))
    y = jax.lax.conv_general_dilated(
        x_nhwc, w_hwio, (stride, stride), [(pad, pad), (pad, pad)],
        rhs_dilation=(dilation, dilation),
        dimension_numbers=("NHWC", "HWIO", "NHWC"))
    mean = jnp.mean(y, axis=(0, 1, 2), keepdims=True)
    var = jnp.mean(jnp.square(y - mean), axis=(0, 1, 2), keepdims=True)
    return (y - mean) * jax.lax.rsqrt(var + EPS) * gamma + beta


def basic_block_reference(x_nchw, params, stride=1, pad=1, dilation=1):
    w1, g1, b1, w2, g2, b2 = params
    x = jnp.transpose(x_nchw, (0, 2, 3, 1)).astype(jnp.float32)
    eff_pad = dilation if dilation > 1 else pad
    out = jnp.maximum(_ref_convbn(x, w1, g1, b1, stride, eff_pad, dilation), 0.0)
    out = _ref_convbn(out, w2, g2, b2, 1, eff_pad, dilation)
    out = out + x
    return jnp.transpose(out, (0, 3, 1, 2))


# ---------------------------------- main ------------------------------------

if __name__ == "__main__":
    key = jax.random.PRNGKey(0)
    k_x, k_w1, k_w2, k_g1, k_b1, k_g2, k_b2 = jax.random.split(key, 7)

    # BasicBlock(inplanes=8, planes=8, stride=1, downsample=None, pad=1, dilation=1)
    N, C, H, W = 2, 8, 16, 16
    planes = C

    x = jax.random.normal(k_x, (N, C, H, W), dtype=jnp.float32)
    w1 = 0.1 * jax.random.normal(k_w1, (planes, C, 3, 3), dtype=jnp.float32)
    w2 = 0.1 * jax.random.normal(k_w2, (planes, planes, 3, 3), dtype=jnp.float32)
    g1 = 1.0 + 0.1 * jax.random.normal(k_g1, (planes,), dtype=jnp.float32)
    b1 = 0.1 * jax.random.normal(k_b1, (planes,), dtype=jnp.float32)
    g2 = 1.0 + 0.1 * jax.random.normal(k_g2, (planes,), dtype=jnp.float32)
    b2 = 0.1 * jax.random.normal(k_b2, (planes,), dtype=jnp.float32)
    params = (w1, g1, b1, w2, g2, b2)

    out = jax.block_until_ready(basic_block_forward(x, params))
    ref = jax.block_until_ready(basic_block_reference(x, params))

    assert out.shape == (N, planes, H, W), out.shape
    err = float(jnp.max(jnp.abs(out - ref)))
    # bf16 MXU operands => relaxed tolerance vs the f32 reference.
    assert err < 1e-1, err

    print("KERNEL_OK")
</pallas_src>

<mosaic_0001>
module attributes {stable_mosaic.version = 11 : i64} {
  func.func @kernel(%arg0: i32, %arg1: memref<32x128xf32, #tpu.memory_space<vmem>>, %arg2: memref<384x128xbf16, #tpu.memory_space<vmem>>, %arg3: memref<384x128xbf16, #tpu.memory_space<vmem>>, %arg4: memref<4x128xf32, #tpu.memory_space<vmem>>, %arg5: memref<128x128xf32, #tpu.memory_space<vmem>>, %arg6: memref<32x128xf32, #tpu.memory_space<vmem>>) attributes {dimension_semantics = [#tpu.dimension_semantics<arbitrary>], iteration_bounds = array<i64: 1>, scalar_prefetch = 0 : i64, scratch_operands = 0 : i64, tpu.core_type = #tpu.core_type<tc>, window_params = [{pipeline_mode = #tpu.pipeline_mode<synchronous>, transform_indices = @transform_0, window_bounds = array<i64: 32, 128>}, {pipeline_mode = #tpu.pipeline_mode<synchronous>, transform_indices = @transform_1, window_bounds = array<i64: 384, 128>}, {pipeline_mode = #tpu.pipeline_mode<synchronous>, transform_indices = @transform_2, window_bounds = array<i64: 384, 128>}, {pipeline_mode = #tpu.pipeline_mode<synchronous>, transform_indices = @transform_3, window_bounds = array<i64: 4, 128>}, {pipeline_mode = #tpu.pipeline_mode<synchronous>, transform_indices = @transform_4, window_bounds = array<i64: 128, 128>}, {pipeline_mode = #tpu.pipeline_mode<synchronous>, transform_indices = @transform_5, window_bounds = array<i64: 32, 128>}]} {
    %c0 = arith.constant 0 : index
    %c0_0 = arith.constant 0 : index
    %0 = vector.load %arg1[%c0, %c0_0] : memref<32x128xf32, #tpu.memory_space<vmem>>, vector<32x128xf32>
    %c0_1 = arith.constant 0 : index
    %c0_2 = arith.constant 0 : index
    %1 = vector.load %arg5[%c0_1, %c0_2] : memref<128x128xf32, #tpu.memory_space<vmem>>, vector<128x128xf32>
    %2 = tpu.iota {dimensions = array<i32: 0>} : vector<32x128xi32>
    %c15_i32 = arith.constant 15 : i32
    %3 = vector.broadcast %c15_i32 : i32 to vector<32x128xi32>
    %4 = arith.andi %2, %3 : vector<32x128xi32>
    %c1_i32 = arith.constant 1 : i32
    %5 = vector.broadcast %c1_i32 : i32 to vector<32x128xi32>
    %6 = arith.cmpi sge, %4, %5 : vector<32x128xi32>
    %c14_i32 = arith.constant 14 : i32
    %7 = vector.broadcast %c14_i32 : i32 to vector<32x128xi32>
    %8 = arith.cmpi sle, %4, %7 : vector<32x128xi32>
    %c0_3 = arith.constant 0 : index
    %c0_4 = arith.constant 0 : index
    %9 = vector.load %arg4[%c0_3, %c0_4] : memref<4x128xf32, #tpu.memory_space<vmem>>, vector<1x128xf32>
    %c1 = arith.constant 1 : index
    %c0_5 = arith.constant 0 : index
    %10 = vector.load %arg4[%c1, %c0_5] : memref<4x128xf32, #tpu.memory_space<vmem>>, vector<1x128xf32>
    %c1_i32_6 = arith.constant 1 : i32
    %11 = tpu.dynamic_rotate %0 by %c1_i32_6 dim 0 : vector<32x128xf32>, i32 -> vector<32x128xf32>
    %cst = arith.constant 0.000000e+00 : f32
    %12 = vector.broadcast %cst : f32 to vector<32x128xf32>
    %13 = arith.select %6, %11, %12 : vector<32x128xi1>, vector<32x128xf32>
    %c31_i32 = arith.constant 31 : i32
    %14 = tpu.dynamic_rotate %0 by %c31_i32 dim 0 : vector<32x128xf32>, i32 -> vector<32x128xf32>
    %cst_7 = arith.constant 0.000000e+00 : f32
    %15 = vector.broadcast %cst_7 : f32 to vector<32x128xf32>
    %16 = arith.select %8, %14, %15 : vector<32x128xi1>, vector<32x128xf32>
    %17 = tpu.concatenate %13, %0, %16 in 1 : vector<32x128xf32>, vector<32x128xf32>, vector<32x128xf32> -> vector<32x384xf32>
    %18 = arith.truncf %17 : vector<32x384xf32> to vector<32x384xbf16>
    %c0_8 = arith.constant 0 : index
    %c0_9 = arith.constant 0 : index
    %19 = vector.load %arg2[%c0_8, %c0_9] : memref<384x128xbf16, #tpu.memory_space<vmem>>, vector<384x128xbf16>
    %cst_10 = arith.constant dense<0.000000e+00> : vector<32x128xf32>
    %20 = tpu.matmul %18, %19, %cst_10 {dimension_numbers = #tpu.dot_dimension_numbers<[1], [0], [0], [1], [0, 0, 1, 1], [], []>} : vector<32x384xbf16>, vector<384x128xbf16>, vector<32x128xf32> -> vector<32x128xf32>
    %cst_11 = arith.constant dense<0.000000e+00> : vector<128xf32>
    %21 = vector.multi_reduction <add>, %20, %cst_11 [0] : vector<32x128xf32> to vector<128xf32>
    %22 = vector.shape_cast %21 : vector<128xf32> to vector<1x128xf32>
    %23 = arith.mulf %20, %20 : vector<32x128xf32>
    %cst_12 = arith.constant dense<0.000000e+00> : vector<128xf32>
    %24 = vector.multi_reduction <add>, %23, %cst_12 [0] : vector<32x128xf32> to vector<128xf32>
    %25 = vector.shape_cast %24 : vector<128xf32> to vector<1x128xf32>
    %26 = tpu.concatenate %22, %25 in 0 : vector<1x128xf32>, vector<1x128xf32> -> vector<2x128xf32>
    %cst_13 = arith.constant dense<0.000000e+00> : vector<2x128xf32>
    %27 = tpu.matmul %26, %1, %cst_13 {dimension_numbers = #tpu.dot_dimension_numbers<[1], [0], [0], [1], [0, 0, 1, 1], [], []>} : vector<2x128xf32>, vector<128x128xf32>, vector<2x128xf32> -> vector<2x128xf32>
    %28 = vector.extract_strided_slice %27 {offsets = [0, 0], sizes = [1, 128], strides = [1, 1]} : vector<2x128xf32> to vector<1x128xf32>
    %cst_14 = arith.constant 0.001953125 : f32
    %29 = vector.broadcast %cst_14 : f32 to vector<1x128xf32>
    %30 = arith.mulf %28, %29 : vector<1x128xf32>
    %31 = vector.extract_strided_slice %27 {offsets = [1, 0], sizes = [1, 128], strides = [1, 1]} : vector<2x128xf32> to vector<1x128xf32>
    %cst_15 = arith.constant 0.001953125 : f32
    %32 = vector.broadcast %cst_15 : f32 to vector<1x128xf32>
    %33 = arith.mulf %31, %32 : vector<1x128xf32>
    %34 = arith.mulf %30, %30 : vector<1x128xf32>
    %35 = arith.subf %33, %34 : vector<1x128xf32>
    %cst_16 = arith.constant 0.000000e+00 : f32
    %36 = vector.broadcast %cst_16 : f32 to vector<1x128xf32>
    %37 = arith.maximumf %35, %36 : vector<1x128xf32>
    %cst_17 = arith.constant 9.99999974E-6 : f32
    %38 = vector.broadcast %cst_17 : f32 to vector<1x128xf32>
    %39 = arith.addf %37, %38 : vector<1x128xf32>
    %40 = math.rsqrt %39 : vector<1x128xf32>
    %41 = arith.mulf %9, %40 : vector<1x128xf32>
    %42 = vector.broadcast %41 : vector<1x128xf32> to vector<32x128xf32>
    %43 = arith.mulf %20, %42 : vector<32x128xf32>
    %44 = arith.mulf %30, %41 : vector<1x128xf32>
    %45 = arith.subf %10, %44 : vector<1x128xf32>
    %46 = vector.broadcast %45 : vector<1x128xf32> to vector<32x128xf32>
    %47 = arith.addf %43, %46 : vector<32x128xf32>
    %cst_18 = arith.constant 0.000000e+00 : f32
    %48 = vector.broadcast %cst_18 : f32 to vector<32x128xf32>
    %49 = arith.maximumf %47, %48 : vector<32x128xf32>
    %c2 = arith.constant 2 : index
    %c0_19 = arith.constant 0 : index
    %50 = vector.load %arg4[%c2, %c0_19] : memref<4x128xf32, #tpu.memory_space<vmem>>, vector<1x128xf32>
    %c3 = arith.constant 3 : index
    %c0_20 = arith.constant 0 : index
    %51 = vector.load %arg4[%c3, %c0_20] : memref<4x128xf32, #tpu.memory_space<vmem>>, vector<1x128xf32>
    %c1_i32_21 = arith.constant 1 : i32
    %52 = tpu.dynamic_rotate %49 by %c1_i32_21 dim 0 : vector<32x128xf32>, i32 -> vector<32x128xf32>
    %cst_22 = arith.constant 0.000000e+00 : f32
    %53 = vector.broadcast %cst_22 : f32 to vector<32x128xf32>
    %54 = arith.select %6, %52, %53 : vector<32x128xi1>, vector<32x128xf32>
    %c31_i32_23 = arith.constant 31 : i32
    %55 = tpu.dynamic_rotate %49 by %c31_i32_23 dim 0 : vector<32x128xf32>, i32 -> vector<32x128xf32>
    %cst_24 = arith.constant 0.000000e+00 : f32
    %56 = vector.broadcast %cst_24 : f32 to vector<32x128xf32>
    %57 = arith.select %8, %55, %56 : vector<32x128xi1>, vector<32x128xf32>
    %58 = tpu.concatenate %54, %49, %57 in 1 : vector<32x128xf32>, vector<32x128xf32>, vector<32x128xf32> -> vector<32x384xf32>
    %59 = arith.truncf %58 : vector<32x384xf32> to vector<32x384xbf16>
    %c0_25 = arith.constant 0 : index
    %c0_26 = arith.constant 0 : index
    %60 = vector.load %arg3[%c0_25, %c0_26] : memref<384x128xbf16, #tpu.memory_space<vmem>>, vector<384x128xbf16>
    %cst_27 = arith.constant dense<0.000000e+00> : vector<32x128xf32>
    %61 = tpu.matmul %59, %60, %cst_27 {dimension_numbers = #tpu.dot_dimension_numbers<[1], [0], [0], [1], [0, 0, 1, 1], [], []>} : vector<32x384xbf16>, vector<384x128xbf16>, vector<32x128xf32> -> vector<32x128xf32>
    %cst_28 = arith.constant dense<0.000000e+00> : vector<128xf32>
    %62 = vector.multi_reduction <add>, %61, %cst_28 [0] : vector<32x128xf32> to vector<128xf32>
    %63 = vector.shape_cast %62 : vector<128xf32> to vector<1x128xf32>
    %64 = arith.mulf %61, %61 : vector<32x128xf32>
    %cst_29 = arith.constant dense<0.000000e+00> : vector<128xf32>
    %65 = vector.multi_reduction <add>, %64, %cst_29 [0] : vector<32x128xf32> to vector<128xf32>
    %66 = vector.shape_cast %65 : vector<128xf32> to vector<1x128xf32>
    %67 = tpu.concatenate %63, %66 in 0 : vector<1x128xf32>, vector<1x128xf32> -> vector<2x128xf32>
    %cst_30 = arith.constant dense<0.000000e+00> : vector<2x128xf32>
    %68 = tpu.matmul %67, %1, %cst_30 {dimension_numbers = #tpu.dot_dimension_numbers<[1], [0], [0], [1], [0, 0, 1, 1], [], []>} : vector<2x128xf32>, vector<128x128xf32>, vector<2x128xf32> -> vector<2x128xf32>
    %69 = vector.extract_strided_slice %68 {offsets = [0, 0], sizes = [1, 128], strides = [1, 1]} : vector<2x128xf32> to vector<1x128xf32>
    %cst_31 = arith.constant 0.001953125 : f32
    %70 = vector.broadcast %cst_31 : f32 to vector<1x128xf32>
    %71 = arith.mulf %69, %70 : vector<1x128xf32>
    %72 = vector.extract_strided_slice %68 {offsets = [1, 0], sizes = [1, 128], strides = [1, 1]} : vector<2x128xf32> to vector<1x128xf32>
    %cst_32 = arith.constant 0.001953125 : f32
    %73 = vector.broadcast %cst_32 : f32 to vector<1x128xf32>
    %74 = arith.mulf %72, %73 : vector<1x128xf32>
    %75 = arith.mulf %71, %71 : vector<1x128xf32>
    %76 = arith.subf %74, %75 : vector<1x128xf32>
    %cst_33 = arith.constant 0.000000e+00 : f32
    %77 = vector.broadcast %cst_33 : f32 to vector<1x128xf32>
    %78 = arith.maximumf %76, %77 : vector<1x128xf32>
    %cst_34 = arith.constant 9.99999974E-6 : f32
    %79 = vector.broadcast %cst_34 : f32 to vector<1x128xf32>
    %80 = arith.addf %78, %79 : vector<1x128xf32>
    %81 = math.rsqrt %80 : vector<1x128xf32>
    %82 = arith.mulf %50, %81 : vector<1x128xf32>
    %83 = vector.broadcast %82 : vector<1x128xf32> to vector<32x128xf32>
    %84 = arith.mulf %61, %83 : vector<32x128xf32>
    %85 = arith.mulf %71, %82 : vector<1x128xf32>
    %86 = arith.subf %51, %85 : vector<1x128xf32>
    %87 = vector.broadcast %86 : vector<1x128xf32> to vector<32x128xf32>
    %88 = arith.addf %84, %87 : vector<32x128xf32>
    %89 = arith.addf %88, %0 : vector<32x128xf32>
    %c0_35 = arith.constant 0 : index
    %c0_36 = arith.constant 0 : index
    %90 = vector.load %arg6[%c0_35, %c0_36] : memref<32x128xf32, #tpu.memory_space<vmem>>, vector<32x128xf32>
    tpu.vector_store %arg6[%c0_35, %c0_36], %89 {strides = array<i32>} : memref<32x128xf32, #tpu.memory_space<vmem>>, vector<32x128xf32>,
    return
  }
  func.func @transform_0(%arg0: i32) -> (i32, i32) {
    %c0_i32 = arith.constant 0 : i32
    %c0_i32_0 = arith.constant 0 : i32
    %c0_i32_1 = arith.constant 0 : i32
    return %c0_i32, %c0_i32_0 : i32, i32
  }
  func.func @transform_1(%arg0: i32) -> (i32, i32) {
    %c0_i32 = arith.constant 0 : i32
    %c0_i32_0 = arith.constant 0 : i32
    %c0_i32_1 = arith.constant 0 : i32
    return %c0_i32, %c0_i32_0 : i32, i32
  }
  func.func @transform_2(%arg0: i32) -> (i32, i32) {
    %c0_i32 = arith.constant 0 : i32
    %c0_i32_0 = arith.constant 0 : i32
    %c0_i32_1 = arith.constant 0 : i32
    return %c0_i32, %c0_i32_0 : i32, i32
  }
  func.func @transform_3(%arg0: i32) -> (i32, i32) {
    %c0_i32 = arith.constant 0 : i32
    %c0_i32_0 = arith.constant 0 : i32
    %c0_i32_1 = arith.constant 0 : i32
    return %c0_i32, %c0_i32_0 : i32, i32
  }
  func.func @transform_4(%arg0: i32) -> (i32, i32) {
    %c0_i32 = arith.constant 0 : i32
    %c0_i32_0 = arith.constant 0 : i32
    %c0_i32_1 = arith.constant 0 : i32
    return %c0_i32, %c0_i32_0 : i32, i32
  }
  func.func @transform_5(%arg0: i32) -> (i32, i32) {
    %c0_i32 = arith.constant 0 : i32
    %c0_i32_0 = arith.constant 0 : i32
    %c0_i32_1 = arith.constant 0 : i32
    return %c0_i32, %c0_i32_0 : i32, i32
  }
}

</mosaic_0001>

<llo_original>
// kernel: tpu_custom_call.1
$region0: #{tpu_custom_call.1}
  #allocation0 [shape = 'u32[]', space=smem, size = 0x4, offset = 0x4, fixed_abs, tag = 'smem constant byte address 0x4 - core index']
  #allocation1 [shape = 'u32[144,128]{1,0:T(1,128)}', space=vmem, size = 0x12000, scoped, tag = 'internal scratch']
  %s0 = inlined_call_operand.hbm [shape: f32[32,128], index: 0, kind: input, shape index: {}]
  %s1 = inlined_call_operand.hbm [shape: bf16[384,128], index: 1, kind: input, shape index: {}]
  %s2 = inlined_call_operand.hbm [shape: bf16[384,128], index: 2, kind: input, shape index: {}]
  %s3 = inlined_call_operand.vmem [shape: f32[4,128], index: 3, kind: input, shape index: {}]
  %s4 = inlined_call_operand.hbm [shape: f32[128,128], index: 4, kind: input, shape index: {}]
  %s5 = inlined_call_operand.hbm [shape: f32[32,128], index: 5, kind: output, shape index: {}]
  %s6 = sld [smem:[#allocation0]]
  $region46: #{tpu_custom_call.1} parent=0
    _
  %s8 = ssub.s32 1, %s6
  %s9 = scalar_select 0, %s8, %s6
  $region1: #{tpu_custom_call.1} parent=0
    #allocation2 [shape = 'u8[16384]{0}', space=vmem, size = 0x4000, scoped, tag = 'input window, operand 0, single buffered']
    #allocation3 [shape = 's32[1]{0}', space=sflag, size = 0x4, scoped, tag = 'scoped memory for tpu_custom_call.1']
    #allocation4 [shape = 's32[1]{0}', space=sflag, size = 0x4, scoped, tag = 'scoped memory for tpu_custom_call.1']
    #allocation5 [shape = 'u8[98304]{0}', space=vmem, size = 0x18000, scoped, tag = 'input window, operand 1, single buffered']
    #allocation6 [shape = 's32[1]{0}', space=sflag, size = 0x4, scoped, tag = 'scoped memory for tpu_custom_call.1']
    #allocation7 [shape = 'u8[98304]{0}', space=vmem, size = 0x18000, scoped, tag = 'input window, operand 2, single buffered']
    #allocation8 [shape = 'u8[65536]{0}', space=vmem, size = 0x10000, scoped, tag = 'input window, operand 4, single buffered']
    #allocation9 [shape = 's32[1]{0}', space=sflag, size = 0x4, scoped, tag = 'scoped memory for tpu_custom_call.1']
    #allocation10 [shape = 'u8[16384]{0}', space=vmem, size = 0x4000, scoped, tag = 'output window, operand 0, single buffered']
    %10 = vsyncpa [#allocation3], 0
    %11 = vsyncpa [#allocation6], 0
    %12 = vsyncpa [#allocation9], 0
    %13 = vsyncpa [#allocation4], 0
    // Predicated region
    $region2: #{tpu_custom_call.1} parent=1 // pred_check
      _
    $region3: #{tpu_custom_call.1} parent=1 // pred_check_branch
      %15 = sbr.rel (0) target = $region5
    $region4: #{tpu_custom_call.1} parent=1 // pred_region
      %s17 = ssub.s32 512, 512
      %18 = vsyncadd [#allocation3], %s17
      %s19 = sshll.u32 [#allocation2], 4
      %s20 = int_to_ptr.vmem [resolvable:$true] %s19
      %25 = dma.hbm_to_vmem [thread:$0]  %s0, 512, %s20, [#allocation3], 128, 128, 8
    $region5: #{tpu_custom_call.1} parent=1 // pred_fallthru
      _
    // Predicated region
    $region6: #{tpu_custom_call.1} parent=1 // pred_check
      _
    $region7: #{tpu_custom_call.1} parent=1 // pred_check_branch
      %27 = sbr.rel (0) target = $region9
    $region8: #{tpu_custom_call.1} parent=1 // pred_region
      %s29 = ssub.s32 3072, 3072
      %30 = vsyncadd [#allocation6], %s29
      %s31 = sshll.u32 [#allocation5], 4
      %s32 = int_to_ptr.vmem [resolvable:$true] %s31
      %37 = dma.hbm_to_vmem [thread:$0]  %s1, 3072, %s32, [#allocation6], 64, 64, 4
    $region9: #{tpu_custom_call.1} parent=1 // pred_fallthru
      _
    // Predicated region
    $region10: #{tpu_custom_call.1} parent=1 // pred_check
      _
    $region11: #{tpu_custom_call.1} parent=1 // pred_check_branch
      %39 = sbr.rel (0) target = $region13
    $region12: #{tpu_custom_call.1} parent=1 // pred_region
      %s41 = ssub.s32 3072, 3072
      %42 = vsyncadd [#allocation6], %s41
      %s43 = sshll.u32 [#allocation7], 4
      %s44 = int_to_ptr.vmem [resolvable:$true] %s43
      %49 = dma.hbm_to_vmem [thread:$0]  %s2, 3072, %s44, [#allocation6], 64, 64, 4
    $region13: #{tpu_custom_call.1} parent=1 // pred_fallthru
      _
    // Predicated region
    $region14: #{tpu_custom_call.1} parent=1 // pred_check
      _
    $region15: #{tpu_custom_call.1} parent=1 // pred_check_branch
      %51 = sbr.rel (0) target = $region17
    $region16: #{tpu_custom_call.1} parent=1 // pred_region
      _
    $region17: #{tpu_custom_call.1} parent=1 // pred_fallthru
      _
    // Predicated region
    $region18: #{tpu_custom_call.1} parent=1 // pred_check
      _
    $region19: #{tpu_custom_call.1} parent=1 // pred_check_branch
      %53 = sbr.rel (0) target = $region21
    $region20: #{tpu_custom_call.1} parent=1 // pred_region
      %s55 = ssub.s32 2048, 2048
      %56 = vsyncadd [#allocation9], %s55
      %s57 = sshll.u32 [#allocation8], 4
      %s58 = int_to_ptr.vmem [resolvable:$true] %s57
      %63 = dma.hbm_to_vmem [thread:$0]  %s4, 2048, %s58, [#allocation9], 128, 128, 8
    $region21: #{tpu_custom_call.1} parent=1 // pred_fallthru
      _
    // Predicated region
    $region22: #{tpu_custom_call.1} parent=1 // pred_check
      _
    $region23: #{tpu_custom_call.1} parent=1 // pred_check_branch
      %65 = sbr.rel (0) target = $region25
    $region24: #{tpu_custom_call.1} parent=1 // pred_region
      %66 = dma.done [#allocation3], 512
    $region25: #{tpu_custom_call.1} parent=1 // pred_fallthru
      _
    // Predicated region
    $region26: #{tpu_custom_call.1} parent=1 // pred_check
      _
    $region27: #{tpu_custom_call.1} parent=1 // pred_check_branch
      %68 = sbr.rel (0) target = $region29
    $region28: #{tpu_custom_call.1} parent=1 // pred_region
      %69 = dma.done [#allocation6], 3072
    $region29: #{tpu_custom_call.1} parent=1 // pred_fallthru
      _
    // Predicated region
    $region30: #{tpu_custom_call.1} parent=1 // pred_check
      _
    $region31: #{tpu_custom_call.1} parent=1 // pred_check_branch
      %71 = sbr.rel (0) target = $region33
    $region32: #{tpu_custom_call.1} parent=1 // pred_region
      %72 = dma.done [#allocation6], 3072
    $region33: #{tpu_custom_call.1} parent=1 // pred_fallthru
      _
    // Predicated region
    $region34: #{tpu_custom_call.1} parent=1 // pred_check
      _
    $region35: #{tpu_custom_call.1} parent=1 // pred_check_branch
      %74 = sbr.rel (0) target = $region37
    $region36: #{tpu_custom_call.1} parent=1 // pred_region
      %75 = dma.done [#allocation9], 2048
    $region37: #{tpu_custom_call.1} parent=1 // pred_fallthru
      _
    %v77 = vld [vmem:[#allocation2] sm:$0xff]
    %v78 = vld [vmem:[#allocation2 + $0x8] sm:$0xff]
    %v79 = vld [vmem:[#allocation2 + $0x10] sm:$0xff]
    %v80 = vld [vmem:[#allocation2 + $0x18] sm:$0xff]
    %v81 = vld [vmem:[#allocation8] sm:$0xff]
    %v82 = vld [vmem:[#allocation8 + $0x8] sm:$0xff]
    %v83 = vld [vmem:[#allocation8 + $0x10] sm:$0xff]
    %v84 = vld [vmem:[#allocation8 + $0x18] sm:$0xff]
    %v85 = vld [vmem:[#allocation8 + $0x20] sm:$0xff]
    %v86 = vld [vmem:[#allocation8 + $0x28] sm:$0xff]
    %v87 = vld [vmem:[#allocation8 + $0x30] sm:$0xff]
    %v88 = vld [vmem:[#allocation8 + $0x38] sm:$0xff]
    %v89 = vld [vmem:[#allocation8 + $0x40] sm:$0xff]
    %v90 = vld [vmem:[#allocation8 + $0x48] sm:$0xff]
    %v91 = vld [vmem:[#allocation8 + $0x50] sm:$0xff]
    %v92 = vld [vmem:[#allocation8 + $0x58] sm:$0xff]
    %v93 = vld [vmem:[#allocation8 + $0x60] sm:$0xff]
    %v94 = vld [vmem:[#allocation8 + $0x68] sm:$0xff]
    %v95 = vld [vmem:[#allocation8 + $0x70] sm:$0xff]
    %v96 = vld [vmem:[#allocation8 + $0x78] sm:$0xff]
    %v97 = vlaneseq
    %v98 = vshrl.u32 %v97, 7
    %v99 = vadd.s32 %v98, 8
    %v100 = vadd.s32 %v98, 16
    %v101 = vadd.s32 %v98, 24
    %v102 = vand.u32 %v98, 15
    %v103 = vand.u32 %v99, 15
    %v104 = vand.u32 %v100, 15
    %v105 = vand.u32 %v101, 15
    %vm106 = vcmp.ge.s32.totalorder %v102, 1
    %vm107 = vcmp.ge.s32.totalorder %v103, 1
    %vm108 = vcmp.ge.s32.totalorder %v104, 1
    %vm109 = vcmp.ge.s32.totalorder %v105, 1
    %vm110 = vcmp.le.s32.totalorder %v102, 14
    %vm111 = vcmp.le.s32.totalorder %v103, 14
    %vm112 = vcmp.le.s32.totalorder %v104, 14
    %vm113 = vcmp.le.s32.totalorder %v105, 14
    %v114 = vld [vmem:[%s3] sm:$0x1]
    %v115 = vld [vmem:[%s3 + $0x1] sm:$0x1]
    %v116 = vrot.slane %v77, 7
    %v117 = vrot.slane %v78, 7
    %v118 = vrot.slane %v79, 7
    %v119 = vrot.slane %v80, 7
    %vm120 = vcmp.lt.s32.totalorder %v98, 1
    %v121 = vsel %vm120, %v118, %v119
    %v122 = vsel %vm120, %v117, %v118
    %v123 = vsel %vm120, %v116, %v117
    %v124 = vsel %vm120, %v119, %v116
    %v125 = vsel %vm106, %v124, 0.0
    %v126 = vsel %vm107, %v123, 0.0
    %v127 = vsel %vm108, %v122, 0.0
    %v128 = vsel %vm109, %v121, 0.0
    %v129 = vrot.slane %v77, 1
    %v130 = vrot.slane %v78, 1
    %v131 = vrot.slane %v79, 1
    %v132 = vrot.slane %v80, 1
    %vm133 = vcmp.lt.s32.totalorder %v98, 7
    %v134 = vsel %vm133, %v131, %v132
    %v135 = vsel %vm133, %v130, %v131
    %v136 = vsel %vm133, %v129, %v130
    %v137 = vsel %vm133, %v132, %v129
    %v138 = vsel %vm110, %v136, 0.0
    %v139 = vsel %vm111, %v135, 0.0
    %v140 = vsel %vm112, %v134, 0.0
    %v141 = vsel %vm113, %v137, 0.0
    %v142 = vpack.c.bf16 %v126, %v125
    %v143 = vpack.c.bf16 %v78, %v77
    %v144 = vpack.c.bf16 %v139, %v138
    %v145 = vpack.c.bf16 %v128, %v127
    %v146 = vpack.c.bf16 %v80, %v79
    %v147 = vpack.c.bf16 %v141, %v140
    %v148 = vld [vmem:[#allocation5] sm:$0xf]
    %v149 = vld [vmem:[#allocation5 + $0x4] sm:$0xf]
    %v150 = vld [vmem:[#allocation5 + $0x8] sm:$0xf]
    %v151 = vld [vmem:[#allocation5 + $0xc] sm:$0xf]
    %v152 = vld [vmem:[#allocation5 + $0x10] sm:$0xf]
    %v153 = vld [vmem:[#allocation5 + $0x14] sm:$0xf]
    %v154 = vld [vmem:[#allocation5 + $0x18] sm:$0xf]
    %v155 = vld [vmem:[#allocation5 + $0x1c] sm:$0xf]
    %v156 = vld [vmem:[#allocation5 + $0x20] sm:$0xf]
    %v157 = vld [vmem:[#allocation5 + $0x24] sm:$0xf]
    %v158 = vld [vmem:[#allocation5 + $0x28] sm:$0xf]
    %v159 = vld [vmem:[#allocation5 + $0x2c] sm:$0xf]
    %v160 = vld [vmem:[#allocation5 + $0x30] sm:$0xf]
    %v161 = vld [vmem:[#allocation5 + $0x34] sm:$0xf]
    %v162 = vld [vmem:[#allocation5 + $0x38] sm:$0xf]
    %v163 = vld [vmem:[#allocation5 + $0x3c] sm:$0xf]
    %v164 = vld [vmem:[#allocation5 + $0x40] sm:$0xf]
    %v165 = vld [vmem:[#allocation5 + $0x44] sm:$0xf]
    %v166 = vld [vmem:[#allocation5 + $0x48] sm:$0xf]
    %v167 = vld [vmem:[#allocation5 + $0x4c] sm:$0xf]
    %v168 = vld [vmem:[#allocation5 + $0x50] sm:$0xf]
    %v169 = vld [vmem:[#allocation5 + $0x54] sm:$0xf]
    %v170 = vld [vmem:[#allocation5 + $0x58] sm:$0xf]
    %v171 = vld [vmem:[#allocation5 + $0x5c] sm:$0xf]
    %v172 = vld [vmem:[#allocation5 + $0x60] sm:$0xf]
    %v173 = vld [vmem:[#allocation5 + $0x64] sm:$0xf]
    %v174 = vld [vmem:[#allocation5 + $0x68] sm:$0xf]
    %v175 = vld [vmem:[#allocation5 + $0x6c] sm:$0xf]
    %v176 = vld [vmem:[#allocation5 + $0x70] sm:$0xf]
    %v177 = vld [vmem:[#allocation5 + $0x74] sm:$0xf]
    %v178 = vld [vmem:[#allocation5 + $0x78] sm:$0xf]
    %v179 = vld [vmem:[#allocation5 + $0x7c] sm:$0xf]
    %v180 = vld [vmem:[#allocation5 + $0x80] sm:$0xf]
    %v181 = vld [vmem:[#allocation5 + $0x84] sm:$0xf]
    %v182 = vld [vmem:[#allocation5 + $0x88] sm:$0xf]
    %v183 = vld [vmem:[#allocation5 + $0x8c] sm:$0xf]
    %v184 = vld [vmem:[#allocation5 + $0x90] sm:$0xf]
    %v185 = vld [vmem:[#allocation5 + $0x94] sm:$0xf]
    %v186 = vld [vmem:[#allocation5 + $0x98] sm:$0xf]
    %v187 = vld [vmem:[#allocation5 + $0x9c] sm:$0xf]
    %v188 = vld [vmem:[#allocation5 + $0xa0] sm:$0xf]
    %v189 = vld [vmem:[#allocation5 + $0xa4] sm:$0xf]
    %v190 = vld [vmem:[#allocation5 + $0xa8] sm:$0xf]
    %v191 = vld [vmem:[#allocation5 + $0xac] sm:$0xf]
    %v192 = vld [vmem:[#allocation5 + $0xb0] sm:$0xf]
    %v193 = vld [vmem:[#allocation5 + $0xb4] sm:$0xf]
    %v194 = vld [vmem:[#allocation5 + $0xb8] sm:$0xf]
    %v195 = vld [vmem:[#allocation5 + $0xbc] sm:$0xf]
    %v244 = vunpack.c.l.b16 %v148
    %v245 = vunpack.c.l.b16 %v149
    %v246 = vunpack.c.l.b16 %v150
    %v247 = vunpack.c.l.b16 %v151
    %v248 = vunpack.c.l.b16 %v152
    %v249 = vunpack.c.l.b16 %v153
    %v250 = vunpack.c.l.b16 %v154
    %v251 = vunpack.c.l.b16 %v155
    %v252 = vunpack.c.l.b16 %v156
    %v253 = vunpack.c.l.b16 %v157
    %v254 = vunpack.c.l.b16 %v158
    %v255 = vunpack.c.l.b16 %v159
    %v256 = vunpack.c.l.b16 %v160
    %v257 = vunpack.c.l.b16 %v161
    %v258 = vunpack.c.l.b16 %v162
    %v259 = vunpack.c.l.b16 %v163
    %v260 = vunpack.c.l.b16 %v164
    %v261 = vunpack.c.l.b16 %v165
    %v262 = vunpack.c.l.b16 %v166
    %v263 = vunpack.c.l.b16 %v167
    %v264 = vunpack.c.l.b16 %v168
    %v265 = vunpack.c.l.b16 %v169
    %v266 = vunpack.c.l.b16 %v170
    %v267 = vunpack.c.l.b16 %v171
    %v268 = vunpack.c.l.b16 %v172
    %v269 = vunpack.c.l.b16 %v173
    %v270 = vunpack.c.l.b16 %v174
    %v271 = vunpack.c.l.b16 %v175
    %v272 = vunpack.c.l.b16 %v176
    %v273 = vunpack.c.l.b16 %v177
    %v274 = vunpack.c.l.b16 %v178
    %v275 = vunpack.c.l.b16 %v179
    %v276 = vunpack.c.l.b16 %v180
    %v277 = vunpack.c.l.b16 %v181
    %v278 = vunpack.c.l.b16 %v182
    %v279 = vunpack.c.l.b16 %v183
    %v280 = vunpack.c.l.b16 %v184
    %v281 = vunpack.c.l.b16 %v185
    %v282 = vunpack.c.l.b16 %v186
    %v283 = vunpack.c.l.b16 %v187
    %v284 = vunpack.c.l.b16 %v188
    %v285 = vunpack.c.l.b16 %v189
    %v286 = vunpack.c.l.b16 %v190
    %v287 = vunpack.c.l.b16 %v191
    %v288 = vunpack.c.l.b16 %v192
    %v289 = vunpack.c.l.b16 %v193
    %v290 = vunpack.c.l.b16 %v194
    %v291 = vunpack.c.l.b16 %v195
    %v292 = vpack.c.b16 %v245, %v244
    %v293 = vpack.c.b16 %v247, %v246
    %v294 = vpack.c.b16 %v249, %v248
    %v295 = vpack.c.b16 %v251, %v250
    %v296 = vpack.c.b16 %v253, %v252
    %v297 = vpack.c.b16 %v255, %v254
    %v298 = vpack.c.b16 %v257, %v256
    %v299 = vpack.c.b16 %v259, %v258
    %v300 = vpack.c.b16 %v261, %v260
    %v301 = vpack.c.b16 %v263, %v262
    %v302 = vpack.c.b16 %v265, %v264
    %v303 = vpack.c.b16 %v267, %v266
    %v304 = vpack.c.b16 %v269, %v268
    %v305 = vpack.c.b16 %v271, %v270
    %v306 = vpack.c.b16 %v273, %v272
    %v307 = vpack.c.b16 %v275, %v274
    %v308 = vpack.c.b16 %v277, %v276
    %v309 = vpack.c.b16 %v279, %v278
    %v310 = vpack.c.b16 %v281, %v280
    %v311 = vpack.c.b16 %v283, %v282
    %v312 = vpack.c.b16 %v285, %v284
    %v313 = vpack.c.b16 %v287, %v286
    %v314 = vpack.c.b16 %v289, %v288
    %v315 = vpack.c.b16 %v291, %v290
    %340 = vmatprep.subr.bf16.mxu0 0
    %341 = vmatpush1.bf16.msra.mxu0 %v292
    %342 = vmatprep.subr.bf16.mxu0 0
    %343 = vmatpush1.bf16.msra.mxu0 %v293
    %344 = vmatprep.subr.bf16.mxu0 0
    %345 = vmatpush1.bf16.msra.mxu0 %v294
    %346 = vmatprep.subr.bf16.mxu0 0
    %347 = vmatpush1.bf16.msra.mxu0 %v295
    %348 = vmatprep.subr.bf16.mxu0 0
    %349 = vmatpush1.bf16.msra.mxu0 %v296
    %350 = vmatprep.subr.bf16.mxu0 0
    %351 = vmatpush1.bf16.msra.mxu0 %v297
    %352 = vmatprep.subr.bf16.mxu0 0
    %353 = vmatpush1.bf16.msra.mxu0 %v298
    %354 = vmatprep.subr.bf16.mxu0 0
    %355 = vmatpush1.bf16.msra.mxu0 %v299
    %356 = vmatprep.subr.bf16.mxu0 0
    %357 = vmatpush1.bf16.msra.mxu0 %v300
    %358 = vmatprep.subr.bf16.mxu0 0
    %359 = vmatpush1.bf16.msra.mxu0 %v301
    %360 = vmatprep.subr.bf16.mxu0 0
    %361 = vmatpush1.bf16.msra.mxu0 %v302
    %362 = vmatprep.subr.bf16.mxu0 0
    %363 = vmatpush1.bf16.msra.mxu0 %v303
    %364 = vmatprep.subr.bf16.mxu0 0
    %365 = vmatpush1.bf16.msra.mxu0 %v304
    %366 = vmatprep.subr.bf16.mxu0 0
    %367 = vmatpush1.bf16.msra.mxu0 %v305
    %368 = vmatprep.subr.bf16.mxu0 0
    %369 = vmatpush1.bf16.msra.mxu0 %v306
    %370 = vmatprep.subr.bf16.mxu0 0
    %371 = vmatpush1.bf16.msra.mxu0 %v307
    %372 = vmatprep.mubr.bf16.mxu0 %v143
    %373 = vmatmul.mubr.bf16.gmra.mrb[0].mxu0 %v142
    %v374 = vpop.f32.mrb[0].mxu0
    %v375 = vadd.f32 0.0, %v374
    %v376 = vpop.f32.mrb[0].mxu0
    %v377 = vpop.f32.mrb[0].mxu0
    %v378 = vadd.f32 0.0, %v377
    %v379 = vpop.f32.mrb[0].mxu0
    %380 = vmatprep.mubr.bf16.mxu0 %v146
    %381 = vmatmul.mubr.bf16.gmra.mrb[0].mxu0 %v145
    %v382 = vpop.f32.mrb[0].mxu0
    %v383 = vadd.f32 0.0, %v382
    %v384 = vpop.f32.mrb[0].mxu0
    %v385 = vpop.f32.mrb[0].mxu0
    %v386 = vadd.f32 0.0, %v385
    %v387 = vpop.f32.mrb[0].mxu0
    %388 = vdwg.mxu0
    %389 = vmatprep.subr.bf16.mxu0 0
    %390 = vmatpush1.bf16.msra.mxu0 %v308
    %391 = vmatprep.subr.bf16.mxu0 0
    %392 = vmatpush1.bf16.msra.mxu0 %v309
    %393 = vmatprep.subr.bf16.mxu0 0
    %394 = vmatpush1.bf16.msra.mxu0 %v310
    %395 = vmatprep.subr.bf16.mxu0 0
    %396 = vmatpush1.bf16.msra.mxu0 %v311
    %397 = vmatprep.subr.bf16.mxu0 0
    %398 = vmatpush1.bf16.msra.mxu0 %v312
    %399 = vmatprep.subr.bf16.mxu0 0
    %400 = vmatpush1.bf16.msra.mxu0 %v313
    %401 = vmatprep.subr.bf16.mxu0 0
    %402 = vmatpush1.bf16.msra.mxu0 %v314
    %403 = vmatprep.subr.bf16.mxu0 0
    %404 = vmatpush1.bf16.msra.mxu0 %v315
    %405 = vmatprep.subr.bf16.mxu0 0
    %406 = vmatpush1.bf16.msra.mxu0 0
    %407 = vmatprep.subr.bf16.mxu0 0
    %408 = vmatpush1.bf16.msra.mxu0 0
    %409 = vmatprep.subr.bf16.mxu0 0
    %410 = vmatpush1.bf16.msra.mxu0 0
    %411 = vmatprep.subr.bf16.mxu0 0
    %412 = vmatpush1.bf16.msra.mxu0 0
    %413 = vmatprep.subr.bf16.mxu0 0
    %414 = vmatpush1.bf16.msra.mxu0 0
    %415 = vmatprep.subr.bf16.mxu0 0
    %416 = vmatpush1.bf16.msra.mxu0 0
    %417 = vmatprep.subr.bf16.mxu0 0
    %418 = vmatpush1.bf16.msra.mxu0 0
    %419 = vmatprep.subr.bf16.mxu0 0
    %420 = vmatpush1.bf16.msra.mxu0 0
    %421 = vmatprep.mubr.bf16.mxu0 0
    %422 = vmatmul.mubr.bf16.gmra.mrb[0].mxu0 %v144
    %v423 = vpop.f32.mrb[0].mxu0
    %v424 = vadd.f32 %v375, %v423
    %v425 = vpop.f32.mrb[0].mxu0
    %v426 = vpop.f32.mrb[0].mxu0
    %v427 = vadd.f32 %v378, %v426
    %v428 = vpop.f32.mrb[0].mxu0
    %429 = vmatprep.mubr.bf16.mxu0 0
    %430 = vmatmul.mubr.bf16.gmra.mrb[0].mxu0 %v147
    %v431 = vpop.f32.mrb[0].mxu0
    %v432 = vadd.f32 %v383, %v431
    %v433 = vpop.f32.mrb[0].mxu0
    %v434 = vpop.f32.mrb[0].mxu0
    %v435 = vadd.f32 %v386, %v434
    %v436 = vpop.f32.mrb[0].mxu0
    %437 = vdwg.mxu0
    %v438 = vadd.f32 %v424, %v427
    %v439 = vadd.f32 %v438, %v432
    %v440 = vadd.f32 %v439, %v435
    %v441 = vrot.slane %v440, 4
    %v442 = vadd.f32 %v440, %v441
    %v443 = vrot.slane %v442, 2
    %v444 = vadd.f32 %v442, %v443
    %v445 = vrot.slane %v444, 1
    %v446 = vadd.f32 %v444, %v445
    %v447 = vmul.f32 %v424, %v424
    %v448 = vmul.f32 %v427, %v427
    %v449 = vmul.f32 %v432, %v432
    %v450 = vmul.f32 %v435, %v435
    %v451 = vadd.f32 %v447, %v448
    %v452 = vadd.f32 %v451, %v449
    %v453 = vadd.f32 %v452, %v450
    %v454 = vrot.slane %v453, 4
    %v455 = vadd.f32 %v453, %v454
    %v456 = vrot.slane %v455, 2
    %v457 = vadd.f32 %v455, %v456
    %v458 = vrot.slane %v457, 1
    %v459 = vadd.f32 %v457, %v458
    %vm460 = vcmask 1040384
    %v461 = vsel %vm460, %v446, %v459
    %462 = vmatprep.subr.mxu0 0.0
    %463 = vmatpush1.msra.mxu0 %v81
    %464 = vmatprep.subr.mxu0 0.0
    %465 = vmatpush1.msra.mxu0 %v82
    %466 = vmatprep.subr.mxu0 0.0
    %467 = vmatpush1.msra.mxu0 %v83
    %468 = vmatprep.subr.mxu0 0.0
    %469 = vmatpush1.msra.mxu0 %v84
    %470 = vmatprep.subr.mxu0 0.0
    %471 = vmatpush1.msra.mxu0 %v85
    %472 = vmatprep.subr.mxu0 0.0
    %473 = vmatpush1.msra.mxu0 %v86
    %474 = vmatprep.subr.mxu0 0.0
    %475 = vmatpush1.msra.mxu0 %v87
    %476 = vmatprep.subr.mxu0 0.0
    %477 = vmatpush1.msra.mxu0 %v88
    %478 = vmatprep.subr.mxu0 0.0
    %479 = vmatpush1.msra.mxu0 %v89
    %480 = vmatprep.subr.mxu0 0.0
    %481 = vmatpush1.msra.mxu0 %v90
    %482 = vmatprep.subr.mxu0 0.0
    %483 = vmatpush1.msra.mxu0 %v91
    %484 = vmatprep.subr.mxu0 0.0
    %485 = vmatpush1.msra.mxu0 %v92
    %486 = vmatprep.subr.mxu0 0.0
    %487 = vmatpush1.msra.mxu0 %v93
    %488 = vmatprep.subr.mxu0 0.0
    %489 = vmatpush1.msra.mxu0 %v94
    %490 = vmatprep.subr.mxu0 0.0
    %491 = vmatpush1.msra.mxu0 %v95
    %492 = vmatprep.subr.mxu0 0.0
    %493 = vmatpush1.msra.mxu0 %v96
    %494 = vmatprep.subr.mxu0 0.0
    %495 = vmatpush1.msra.mxu0 0.0
    %496 = vmatprep.subr.mxu0 0.0
    %497 = vmatpush1.msra.mxu0 0.0
    %498 = vmatprep.subr.mxu0 0.0
    %499 = vmatpush1.msra.mxu0 0.0
    %500 = vmatprep.subr.mxu0 0.0
    %501 = vmatpush1.msra.mxu0 0.0
    %502 = vmatprep.subr.mxu0 0.0
    %503 = vmatpush1.msra.mxu0 0.0
    %504 = vmatprep.subr.mxu0 0.0
    %505 = vmatpush1.msra.mxu0 0.0
    %506 = vmatprep.subr.mxu0 0.0
    %507 = vmatpush1.msra.mxu0 0.0
    %508 = vmatprep.subr.mxu0 0.0
    %509 = vmatpush1.msra.mxu0 0.0
    %510 = vmatprep.subr.mxu0 0.0
    %511 = vmatpush1.msra.mxu0 0.0
    %512 = vmatprep.subr.mxu0 0.0
    %513 = vmatpush1.msra.mxu0 0.0
    %514 = vmatprep.subr.mxu0 0.0
    %515 = vmatpush1.msra.mxu0 0.0
    %516 = vmatprep.subr.mxu0 0.0
    %517 = vmatpush1.msra.mxu0 0.0
    %518 = vmatprep.subr.mxu0 0.0
    %519 = vmatpush1.msra.mxu0 0.0
    %520 = vmatprep.subr.mxu0 0.0
    %521 = vmatpush1.msra.mxu0 0.0
    %522 = vmatprep.subr.mxu0 0.0
    %523 = vmatpush1.msra.mxu0 0.0
    %524 = vmatprep.subr.mxu0 0.0
    %525 = vmatpush1.msra.mxu0 0.0
    %526 = vmatprep.mubr.f32.mxu0 0.0
    %527 = vmatmul.mubr.f32.gmra.mrb[0].mxu0 %v461
    %v528 = vpop.f32.mrb[0].mxu0
    %v529 = vadd.f32 0.0, %v528
    %v530 = vpop.f32.mrb[0].mxu0
    %531 = vdwg.mxu0
    %v532 = vmul.f32 %v529, 0.001953125
    %v533 = vmul.f32 %v532, %v532
    %v535 = vrot.slane %v533, 7
    %v537 = vsub.f32 %v532, %v535
    %v538 = vmax.f32 %v537, 0.0
    %v539 = vadd.f32 %v538, 1e-05
    %v540 = vrsqrt.pop %v539
    %v542 = vrot.slane %v540, 1
    %v544 = vmul.f32 %v114, %v542
    %v545 = vlaneseq
    %v546 = vshrl.u32 %v545, 7
    %v547 = vsub.s32 0, %v546
    %v548 = vrot.slane %v544, %v547
    %v549 = vmul.f32 %v424, %v548
    %v550 = vmul.f32 %v427, %v548
    %v551 = vmul.f32 %v432, %v548
    %v552 = vmul.f32 %v435, %v548
    %v553 = vmul.f32 %v532, %v544
    %v554 = vsub.f32 %v115, %v553
    %v555 = vlaneseq
    %v556 = vshrl.u32 %v555, 7
    %v557 = vsub.s32 0, %v556
    %v558 = vrot.slane %v554, %v557
    %v559 = vadd.f32 %v549, %v558
    %v560 = vadd.f32 %v550, %v558
    %v561 = vadd.f32 %v551, %v558
    %v562 = vadd.f32 %v552, %v558
    %v563 = vmax.f32 %v559, 0.0
    %v564 = vmax.f32 %v560, 0.0
    %v565 = vmax.f32 %v561, 0.0
    %v566 = vmax.f32 %v562, 0.0
    %v567 = vld [vmem:[%s3 + $0x2] sm:$0x1]
    %v568 = vld [vmem:[%s3 + $0x3] sm:$0x1]
    %v569 = vrot.slane %v563, 7
    %v570 = vrot.slane %v564, 7
    %v571 = vrot.slane %v565, 7
    %v572 = vrot.slane %v566, 7
    %v573 = vsel %vm120, %v571, %v572
    %v574 = vsel %vm120, %v570, %v571
    %v575 = vsel %vm120, %v569, %v570
    %v576 = vsel %vm120, %v572, %v569
    %v577 = vsel %vm106, %v576, 0.0
    %v578 = vsel %vm107, %v575, 0.0
    %v579 = vsel %vm108, %v574, 0.0
    %v580 = vsel %vm109, %v573, 0.0
    %v581 = vrot.slane %v563, 1
    %v582 = vrot.slane %v564, 1
    %v583 = vrot.slane %v565, 1
    %v584 = vrot.slane %v566, 1
    %v585 = vsel %vm133, %v583, %v584
    %v586 = vsel %vm133, %v582, %v583
    %v587 = vsel %vm133, %v581, %v582
    %v588 = vsel %vm133, %v584, %v581
    %v589 = vsel %vm110, %v587, 0.0
    %v590 = vsel %vm111, %v586, 0.0
    %v591 = vsel %vm112, %v585, 0.0
    %v592 = vsel %vm113, %v588, 0.0
    %v593 = vpack.c.bf16 %v578, %v577
    %v594 = vpack.c.bf16 %v564, %v563
    %v595 = vpack.c.bf16 %v590, %v589
    %v596 = vpack.c.bf16 %v580, %v579
    %v597 = vpack.c.bf16 %v566, %v565
    %v598 = vpack.c.bf16 %v592, %v591
    %v599 = vld [vmem:[#allocation7] sm:$0xf]
    %v600 = vld [vmem:[#allocation7 + $0x4] sm:$0xf]
    %v601 = vld [vmem:[#allocation7 + $0x8] sm:$0xf]
    %v602 = vld [vmem:[#allocation7 + $0xc] sm:$0xf]
    %v603 = vld [vmem:[#allocation7 + $0x10] sm:$0xf]
    %v604 = vld [vmem:[#allocation7 + $0x14] sm:$0xf]
    %v605 = vld [vmem:[#allocation7 + $0x18] sm:$0xf]
    %v606 = vld [vmem:[#allocation7 + $0x1c] sm:$0xf]
    %v607 = vld [vmem:[#allocation7 + $0x20] sm:$0xf]
    %v608 = vld [vmem:[#allocation7 + $0x24] sm:$0xf]
    %v609 = vld [vmem:[#allocation7 + $0x28] sm:$0xf]
    %v610 = vld [vmem:[#allocation7 + $0x2c] sm:$0xf]
    %v611 = vld [vmem:[#allocation7 + $0x30] sm:$0xf]
    %v612 = vld [vmem:[#allocation7 + $0x34] sm:$0xf]
    %v613 = vld [vmem:[#allocation7 + $0x38] sm:$0xf]
    %v614 = vld [vmem:[#allocation7 + $0x3c] sm:$0xf]
    %v615 = vld [vmem:[#allocation7 + $0x40] sm:$0xf]
    %v616 = vld [vmem:[#allocation7 + $0x44] sm:$0xf]
    %v617 = vld [vmem:[#allocation7 + $0x48] sm:$0xf]
    %v618 = vld [vmem:[#allocation7 + $0x4c] sm:$0xf]
    %v619 = vld [vmem:[#allocation7 + $0x50] sm:$0xf]
    %v620 = vld [vmem:[#allocation7 + $0x54] sm:$0xf]
    %v621 = vld [vmem:[#allocation7 + $0x58] sm:$0xf]
    %v622 = vld [vmem:[#allocation7 + $0x5c] sm:$0xf]
    %v623 = vld [vmem:[#allocation7 + $0x60] sm:$0xf]
    %v624 = vld [vmem:[#allocation7 + $0x64] sm:$0xf]
    %v625 = vld [vmem:[#allocation7 + $0x68] sm:$0xf]
    %v626 = vld [vmem:[#allocation7 + $0x6c] sm:$0xf]
    %v627 = vld [vmem:[#allocation7 + $0x70] sm:$0xf]
    %v628 = vld [vmem:[#allocation7 + $0x74] sm:$0xf]
    %v629 = vld [vmem:[#allocation7 + $0x78] sm:$0xf]
    %v630 = vld [vmem:[#allocation7 + $0x7c] sm:$0xf]
    %v631 = vld [vmem:[#allocation7 + $0x80] sm:$0xf]
    %v632 = vld [vmem:[#allocation7 + $0x84] sm:$0xf]
    %v633 = vld [vmem:[#allocation7 + $0x88] sm:$0xf]
    %v634 = vld [vmem:[#allocation7 + $0x8c] sm:$0xf]
    %v635 = vld [vmem:[#allocation7 + $0x90] sm:$0xf]
    %v636 = vld [vmem:[#allocation7 + $0x94] sm:$0xf]
    %v637 = vld [vmem:[#allocation7 + $0x98] sm:$0xf]
    %v638 = vld [vmem:[#allocation7 + $0x9c] sm:$0xf]
    %v639 = vld [vmem:[#allocation7 + $0xa0] sm:$0xf]
    %v640 = vld [vmem:[#allocation7 + $0xa4] sm:$0xf]
    %v641 = vld [vmem:[#allocation7 + $0xa8] sm:$0xf]
    %v642 = vld [vmem:[#allocation7 + $0xac] sm:$0xf]
    %v643 = vld [vmem:[#allocation7 + $0xb0] sm:$0xf]
    %v644 = vld [vmem:[#allocation7 + $0xb4] sm:$0xf]
    %v645 = vld [vmem:[#allocation7 + $0xb8] sm:$0xf]
    %v646 = vld [vmem:[#allocation7 + $0xbc] sm:$0xf]
    %v695 = vunpack.c.l.b16 %v599
    %v696 = vunpack.c.l.b16 %v600
    %v697 = vunpack.c.l.b16 %v601
    %v698 = vunpack.c.l.b16 %v602
    %v699 = vunpack.c.l.b16 %v603
    %v700 = vunpack.c.l.b16 %v604
    %v701 = vunpack.c.l.b16 %v605
    %v702 = vunpack.c.l.b16 %v606
    %v703 = vunpack.c.l.b16 %v607
    %v704 = vunpack.c.l.b16 %v608
    %v705 = vunpack.c.l.b16 %v609
    %v706 = vunpack.c.l.b16 %v610
    %v707 = vunpack.c.l.b16 %v611
    %v708 = vunpack.c.l.b16 %v612
    %v709 = vunpack.c.l.b16 %v613
    %v710 = vunpack.c.l.b16 %v614
    %v711 = vunpack.c.l.b16 %v615
    %v712 = vunpack.c.l.b16 %v616
    %v713 = vunpack.c.l.b16 %v617
    %v714 = vunpack.c.l.b16 %v618
    %v715 = vunpack.c.l.b16 %v619
    %v716 = vunpack.c.l.b16 %v620
    %v717 = vunpack.c.l.b16 %v621
    %v718 = vunpack.c.l.b16 %v622
    %v719 = vunpack.c.l.b16 %v623
    %v720 = vunpack.c.l.b16 %v624
    %v721 = vunpack.c.l.b16 %v625
    %v722 = vunpack.c.l.b16 %v626
    %v723 = vunpack.c.l.b16 %v627
    %v724 = vunpack.c.l.b16 %v628
    %v725 = vunpack.c.l.b16 %v629
    %v726 = vunpack.c.l.b16 %v630
    %v727 = vunpack.c.l.b16 %v631
    %v728 = vunpack.c.l.b16 %v632
    %v729 = vunpack.c.l.b16 %v633
    %v730 = vunpack.c.l.b16 %v634
    %v731 = vunpack.c.l.b16 %v635
    %v732 = vunpack.c.l.b16 %v636
    %v733 = vunpack.c.l.b16 %v637
    %v734 = vunpack.c.l.b16 %v638
    %v735 = vunpack.c.l.b16 %v639
    %v736 = vunpack.c.l.b16 %v640
    %v737 = vunpack.c.l.b16 %v641
    %v738 = vunpack.c.l.b16 %v642
    %v739 = vunpack.c.l.b16 %v643
    %v740 = vunpack.c.l.b16 %v644
    %v741 = vunpack.c.l.b16 %v645
    %v742 = vunpack.c.l.b16 %v646
    %v743 = vpack.c.b16 %v696, %v695
    %v744 = vpack.c.b16 %v698, %v697
    %v745 = vpack.c.b16 %v700, %v699
    %v746 = vpack.c.b16 %v702, %v701
    %v747 = vpack.c.b16 %v704, %v703
    %v748 = vpack.c.b16 %v706, %v705
    %v749 = vpack.c.b16 %v708, %v707
    %v750 = vpack.c.b16 %v710, %v709
    %v751 = vpack.c.b16 %v712, %v711
    %v752 = vpack.c.b16 %v714, %v713
    %v753 = vpack.c.b16 %v716, %v715
    %v754 = vpack.c.b16 %v718, %v717
    %v755 = vpack.c.b16 %v720, %v719
    %v756 = vpack.c.b16 %v722, %v721
    %v757 = vpack.c.b16 %v724, %v723
    %v758 = vpack.c.b16 %v726, %v725
    %v759 = vpack.c.b16 %v728, %v727
    %v760 = vpack.c.b16 %v730, %v729
    %v761 = vpack.c.b16 %v732, %v731
    %v762 = vpack.c.b16 %v734, %v733
    %v763 = vpack.c.b16 %v736, %v735
    %v764 = vpack.c.b16 %v738, %v737
    %v765 = vpack.c.b16 %v740, %v739
    %v766 = vpack.c.b16 %v742, %v741
    %791 = vmatprep.subr.bf16.mxu0 0
    %792 = vmatpush1.bf16.msra.mxu0 %v743
    %793 = vmatprep.subr.bf16.mxu0 0
    %794 = vmatpush1.bf16.msra.mxu0 %v744
    %795 = vmatprep.subr.bf16.mxu0 0
    %796 = vmatpush1.bf16.msra.mxu0 %v745
    %797 = vmatprep.subr.bf16.mxu0 0
    %798 = vmatpush1.bf16.msra.mxu0 %v746
    %799 = vmatprep.subr.bf16.mxu0 0
    %800 = vmatpush1.bf16.msra.mxu0 %v747
    %801 = vmatprep.subr.bf16.mxu0 0
    %802 = vmatpush1.bf16.msra.mxu0 %v748
    %803 = vmatprep.subr.bf16.mxu0 0
    %804 = vmatpush1.bf16.msra.mxu0 %v749
    %805 = vmatprep.subr.bf16.mxu0 0
    %806 = vmatpush1.bf16.msra.mxu0 %v750
    %807 = vmatprep.subr.bf16.mxu0 0
    %808 = vmatpush1.bf16.msra.mxu0 %v751
    %809 = vmatprep.subr.bf16.mxu0 0
    %810 = vmatpush1.bf16.msra.mxu0 %v752
    %811 = vmatprep.subr.bf16.mxu0 0
    %812 = vmatpush1.bf16.msra.mxu0 %v753
    %813 = vmatprep.subr.bf16.mxu0 0
    %814 = vmatpush1.bf16.msra.mxu0 %v754
    %815 = vmatprep.subr.bf16.mxu0 0
    %816 = vmatpush1.bf16.msra.mxu0 %v755
    %817 = vmatprep.subr.bf16.mxu0 0
    %818 = vmatpush1.bf16.msra.mxu0 %v756
    %819 = vmatprep.subr.bf16.mxu0 0
    %820 = vmatpush1.bf16.msra.mxu0 %v757
    %821 = vmatprep.subr.bf16.mxu0 0
    %822 = vmatpush1.bf16.msra.mxu0 %v758
    %823 = vmatprep.mubr.bf16.mxu0 %v594
    %824 = vmatmul.mubr.bf16.gmra.mrb[0].mxu0 %v593
    %v825 = vpop.f32.mrb[0].mxu0
    %v826 = vadd.f32 0.0, %v825
    %v827 = vpop.f32.mrb[0].mxu0
    %v828 = vpop.f32.mrb[0].mxu0
    %v829 = vadd.f32 0.0, %v828
    %v830 = vpop.f32.mrb[0].mxu0
    %831 = vmatprep.mubr.bf16.mxu0 %v597
    %832 = vmatmul.mubr.bf16.gmra.mrb[0].mxu0 %v596
    %v833 = vpop.f32.mrb[0].mxu0
    %v834 = vadd.f32 0.0, %v833
    %v835 = vpop.f32.mrb[0].mxu0
    %v836 = vpop.f32.mrb[0].mxu0
    %v837 = vadd.f32 0.0, %v836
    %v838 = vpop.f32.mrb[0].mxu0
    %839 = vdwg.mxu0
    %840 = vmatprep.subr.bf16.mxu0 0
    %841 = vmatpush1.bf16.msra.mxu0 %v759
    %842 = vmatprep.subr.bf16.mxu0 0
    %843 = vmatpush1.bf16.msra.mxu0 %v760
    %844 = vmatprep.subr.bf16.mxu0 0
    %845 = vmatpush1.bf16.msra.mxu0 %v761
    %846 = vmatprep.subr.bf16.mxu0 0
    %847 = vmatpush1.bf16.msra.mxu0 %v762
    %848 = vmatprep.subr.bf16.mxu0 0
    %849 = vmatpush1.bf16.msra.mxu0 %v763
    %850 = vmatprep.subr.bf16.mxu0 0
    %851 = vmatpush1.bf16.msra.mxu0 %v764
    %852 = vmatprep.subr.bf16.mxu0 0
    %853 = vmatpush1.bf16.msra.mxu0 %v765
    %854 = vmatprep.subr.bf16.mxu0 0
    %855 = vmatpush1.bf16.msra.mxu0 %v766
    %856 = vmatprep.subr.bf16.mxu0 0
    %857 = vmatpush1.bf16.msra.mxu0 0
    %858 = vmatprep.subr.bf16.mxu0 0
    %859 = vmatpush1.bf16.msra.mxu0 0
    %860 = vmatprep.subr.bf16.mxu0 0
    %861 = vmatpush1.bf16.msra.mxu0 0
    %862 = vmatprep.subr.bf16.mxu0 0
    %863 = vmatpush1.bf16.msra.mxu0 0
    %864 = vmatprep.subr.bf16.mxu0 0
    %865 = vmatpush1.bf16.msra.mxu0 0
    %866 = vmatprep.subr.bf16.mxu0 0
    %867 = vmatpush1.bf16.msra.mxu0 0
    %868 = vmatprep.subr.bf16.mxu0 0
    %869 = vmatpush1.bf16.msra.mxu0 0
    %870 = vmatprep.subr.bf16.mxu0 0
    %871 = vmatpush1.bf16.msra.mxu0 0
    %872 = vmatprep.mubr.bf16.mxu0 0
    %873 = vmatmul.mubr.bf16.gmra.mrb[0].mxu0 %v595
    %v874 = vpop.f32.mrb[0].mxu0
    %v875 = vadd.f32 %v826, %v874
    %v876 = vpop.f32.mrb[0].mxu0
    %v877 = vpop.f32.mrb[0].mxu0
    %v878 = vadd.f32 %v829, %v877
    %v879 = vpop.f32.mrb[0].mxu0
    %880 = vmatprep.mubr.bf16.mxu0 0
    %881 = vmatmul.mubr.bf16.gmra.mrb[0].mxu0 %v598
    %v882 = vpop.f32.mrb[0].mxu0
    %v883 = vadd.f32 %v834, %v882
    %v884 = vpop.f32.mrb[0].mxu0
    %v885 = vpop.f32.mrb[0].mxu0
    %v886 = vadd.f32 %v837, %v885
    %v887 = vpop.f32.mrb[0].mxu0
    %888 = vdwg.mxu0
    %v889 = vadd.f32 %v875, %v878
    %v890 = vadd.f32 %v889, %v883
    %v891 = vadd.f32 %v890, %v886
    %v892 = vrot.slane %v891, 4
    %v893 = vadd.f32 %v891, %v892
    %v894 = vrot.slane %v893, 2
    %v895 = vadd.f32 %v893, %v894
    %v896 = vrot.slane %v895, 1
    %v897 = vadd.f32 %v895, %v896
    %v898 = vmul.f32 %v875, %v875
    %v899 = vmul.f32 %v878, %v878
    %v900 = vmul.f32 %v883, %v883
    %v901 = vmul.f32 %v886, %v886
    %v902 = vadd.f32 %v898, %v899
    %v903 = vadd.f32 %v902, %v900
    %v904 = vadd.f32 %v903, %v901
    %v905 = vrot.slane %v904, 4
    %v906 = vadd.f32 %v904, %v905
    %v907 = vrot.slane %v906, 2
    %v908 = vadd.f32 %v906, %v907
    %v909 = vrot.slane %v908, 1
    %v910 = vadd.f32 %v908, %v909
    %v911 = vsel %vm460, %v897, %v910
    %912 = vmatprep.subr.mxu0 0.0
    %913 = vmatpush1.msra.mxu0 %v81
    %914 = vmatprep.subr.mxu0 0.0
    %915 = vmatpush1.msra.mxu0 %v82
    %916 = vmatprep.subr.mxu0 0.0
    %917 = vmatpush1.msra.mxu0 %v83
    %918 = vmatprep.subr.mxu0 0.0
    %919 = vmatpush1.msra.mxu0 %v84
    %920 = vmatprep.subr.mxu0 0.0
    %921 = vmatpush1.msra.mxu0 %v85
    %922 = vmatprep.subr.mxu0 0.0
    %923 = vmatpush1.msra.mxu0 %v86
    %924 = vmatprep.subr.mxu0 0.0
    %925 = vmatpush1.msra.mxu0 %v87
    %926 = vmatprep.subr.mxu0 0.0
    %927 = vmatpush1.msra.mxu0 %v88
    %928 = vmatprep.subr.mxu0 0.0
    %929 = vmatpush1.msra.mxu0 %v89
    %930 = vmatprep.subr.mxu0 0.0
    %931 = vmatpush1.msra.mxu0 %v90
    %932 = vmatprep.subr.mxu0 0.0
    %933 = vmatpush1.msra.mxu0 %v91
    %934 = vmatprep.subr.mxu0 0.0
    %935 = vmatpush1.msra.mxu0 %v92
    %936 = vmatprep.subr.mxu0 0.0
    %937 = vmatpush1.msra.mxu0 %v93
    %938 = vmatprep.subr.mxu0 0.0
    %939 = vmatpush1.msra.mxu0 %v94
    %940 = vmatprep.subr.mxu0 0.0
    %941 = vmatpush1.msra.mxu0 %v95
    %942 = vmatprep.subr.mxu0 0.0
    %943 = vmatpush1.msra.mxu0 %v96
    %944 = vmatprep.subr.mxu0 0.0
    %945 = vmatpush1.msra.mxu0 0.0
    %946 = vmatprep.subr.mxu0 0.0
    %947 = vmatpush1.msra.mxu0 0.0
    %948 = vmatprep.subr.mxu0 0.0
    %949 = vmatpush1.msra.mxu0 0.0
    %950 = vmatprep.subr.mxu0 0.0
    %951 = vmatpush1.msra.mxu0 0.0
    %952 = vmatprep.subr.mxu0 0.0
    %953 = vmatpush1.msra.mxu0 0.0
    %954 = vmatprep.subr.mxu0 0.0
    %955 = vmatpush1.msra.mxu0 0.0
    %956 = vmatprep.subr.mxu0 0.0
    %957 = vmatpush1.msra.mxu0 0.0
    %958 = vmatprep.subr.mxu0 0.0
    %959 = vmatpush1.msra.mxu0 0.0
    %960 = vmatprep.subr.mxu0 0.0
    %961 = vmatpush1.msra.mxu0 0.0
    %962 = vmatprep.subr.mxu0 0.0
    %963 = vmatpush1.msra.mxu0 0.0
    %964 = vmatprep.subr.mxu0 0.0
    %965 = vmatpush1.msra.mxu0 0.0
    %966 = vmatprep.subr.mxu0 0.0
    %967 = vmatpush1.msra.mxu0 0.0
    %968 = vmatprep.subr.mxu0 0.0
    %969 = vmatpush1.msra.mxu0 0.0
    %970 = vmatprep.subr.mxu0 0.0
    %971 = vmatpush1.msra.mxu0 0.0
    %972 = vmatprep.subr.mxu0 0.0
    %973 = vmatpush1.msra.mxu0 0.0
    %974 = vmatprep.subr.mxu0 0.0
    %975 = vmatpush1.msra.mxu0 0.0
    %976 = vmatprep.mubr.f32.mxu0 0.0
    %977 = vmatmul.mubr.f32.gmra.mrb[0].mxu0 %v911
    %v978 = vpop.f32.mrb[0].mxu0
    %v979 = vadd.f32 0.0, %v978
    %v980 = vpop.f32.mrb[0].mxu0
    %981 = vdwg.mxu0
    %v982 = vmul.f32 %v979, 0.001953125
    %v983 = vmul.f32 %v982, %v982
    %v985 = vrot.slane %v983, 7
    %v987 = vsub.f32 %v982, %v985
    %v988 = vmax.f32 %v987, 0.0
    %v989 = vadd.f32 %v988, 1e-05
    %v990 = vrsqrt.pop %v989
    %v992 = vrot.slane %v990, 1
    %v994 = vmul.f32 %v567, %v992
    %v995 = vlaneseq
    %v996 = vshrl.u32 %v995, 7
    %v997 = vsub.s32 0, %v996
    %v998 = vrot.slane %v994, %v997
    %v999 = vmul.f32 %v875, %v998
    %v1000 = vmul.f32 %v878, %v998
    %v1001 = vmul.f32 %v883, %v998
    %v1002 = vmul.f32 %v886, %v998
    %v1003 = vmul.f32 %v982, %v994
    %v1004 = vsub.f32 %v568, %v1003
    %v1005 = vlaneseq
    %v1006 = vshrl.u32 %v1005, 7
    %v1007 = vsub.s32 0, %v1006
    %v1008 = vrot.slane %v1004, %v1007
    %v1009 = vadd.f32 %v999, %v1008
    %v1010 = vadd.f32 %v1000, %v1008
    %v1011 = vadd.f32 %v1001, %v1008
    %v1012 = vadd.f32 %v1002, %v1008
    %v1013 = vadd.f32 %v1009, %v77
    %v1014 = vadd.f32 %v1010, %v78
    %v1015 = vadd.f32 %v1011, %v79
    %v1016 = vadd.f32 %v1012, %v80
    %1017 = vst [vmem:[#allocation10] sm:$0xff] %v1013
    %1018 = vst [vmem:[#allocation10 + $0x8] sm:$0xff] %v1014
    %1019 = vst [vmem:[#allocation10 + $0x10] sm:$0xff] %v1015
    %1020 = vst [vmem:[#allocation10 + $0x18] sm:$0xff] %v1016
    // Predicated region
    $region38: #{tpu_custom_call.1} parent=1 // pred_check
      _
    $region39: #{tpu_custom_call.1} parent=1 // pred_check_branch
      %1022 = sbr.rel (0) target = $region41
    $region40: #{tpu_custom_call.1} parent=1 // pred_region
      %s1024 = ssub.s32 512, 512
      %1025 = vsyncadd [#allocation4], %s1024
      %s1026 = sshll.u32 [#allocation10], 4
      %s1027 = int_to_ptr.vmem [resolvable:$true] %s1026
      %1032 = dma.vmem_to_hbm [thread:$0]  %s1027, 512, %s5, [#allocation4], 128, 128, 8
    $region41: #{tpu_custom_call.1} parent=1 // pred_fallthru
      _
    // Predicated region
    $region42: #{tpu_custom_call.1} parent=1 // pred_check
      _
    $region43: #{tpu_custom_call.1} parent=1 // pred_check_branch
      %1034 = sbr.rel (0) target = $region45
    $region44: #{tpu_custom_call.1} parent=1 // pred_region
      %1035 = dma.done [#allocation4], 512
    $region45: #{tpu_custom_call.1} parent=1 // pred_fallthru
      _
    %1036 = vsyncpa [#allocation3], 1
    %1037 = vsyncpa [#allocation6], 1
    %1038 = vsyncpa [#allocation9], 1
    %1039 = vsyncpa [#allocation4], 1

</llo_original>
